<compile_context>
chip_gen: v5e
topology: v5e:2x2
jax: 0.10.0
libtpu: 0.0.40
codegen_flags: <defaults>
</compile_context>

<pallas_src>
import jax
import jax.numpy as jnp
from jax import lax
from jax.experimental import pallas as pl
from jax.experimental.pallas import tpu as pltpu


def _pairwise_linear_kernel(w_ref, x_ref, o_ref):
    """One (block_rows, 128) tile of the flat (B*2,)-layout input.

    Lane 2k holds x0 of a batch row, lane 2k+1 holds x1 of the same row.
    Output in the same layout:
        even lane: y0 = w00*x0 + w01*x1
        odd  lane: y1 = w10*x0 + w11*x1
    The pair partner lives one lane over; fetch it with XLU lane rotations
    (free slot here) and a lane-parity select.
    """
    x = x_ref[...].astype(jnp.float32)          # (S, 128)
    nlanes = x.shape[-1]                        # 128

    fwd = pltpu.roll(x, shift=nlanes - 1, axis=1)   # fwd[..., l] = x[..., (l + 1) % 128]
    bwd = pltpu.roll(x, shift=1, axis=1)            # bwd[..., l] = x[..., (l - 1) % 128]

    lane = lax.broadcasted_iota(jnp.int32, x.shape, 1)
    is_x0 = (lane & 1) == 0                     # even lane -> holds x0
    x_partner = jnp.where(is_x0, fwd, bwd)      # the other element of the pair

    # 2x2 weight as SMEM scalar reads (PyTorch layout W[out, in]); no MXU for K=2.
    w00 = w_ref[0, 0]
    w01 = w_ref[0, 1]
    w10 = w_ref[1, 0]
    w11 = w_ref[1, 1]
    w_self = jnp.where(is_x0, w00, w11)         # multiplies the in-lane element
    w_cross = jnp.where(is_x0, w01, w10)        # multiplies the partner element

    o_ref[...] = (w_self * x + w_cross * x_partner).astype(o_ref.dtype)


def double_integrator_compression(x, weight, *, max_block_rows=4096, force_pallas=False):
    """y = x @ weight.T  (nn.Linear(2, 2, bias=False) semantics)."""
    B, IN = x.shape
    OUT, IN_w = weight.shape
    assert IN == 2 and IN_w == 2 and OUT == 2

    w = weight.astype(jnp.float32)

    # Small-batch fast path: below a few hundred KiB the Pallas launch + relayout
    # dominates; let XLA fuse the 2x2 matmul instead.
    if not force_pallas and B * IN * x.dtype.itemsize < (256 << 10):
        return (x.astype(jnp.float32) @ w.T).astype(x.dtype)

    # Native-layout flat view: (B, 2) row-major == flat length 2B == (rows, 128).
    # This reshape is a free view (same linear order) -- no transpose HBM passes.
    pair_per_row = 64                                   # batch elements per 128-lane row
    Bp = ((B + pair_per_row - 1) // pair_per_row) * pair_per_row
    xp = x if Bp == B else jnp.pad(x, ((0, Bp - B), (0, 0)))   # rare ragged case only
    rows = (Bp * IN) // 128
    x_flat = xp.reshape(rows, 128)

    # MiB-scale row tiles (multiple of 8 sublanes). 4096 rows * 128 lanes * 4 B = 2 MiB
    # per input buffer; double-buffered in+out = 8 MiB VMEM. Keep >= 2 grid steps when
    # there is enough data so the "parallel" axis can shard across v7x's two cores.
    block_rows = min(max_block_rows, max(8, ((rows + 15) // 16) * 8))
    grid = (pl.cdiv(rows, block_rows),)

    y_flat = pl.pallas_call(
        _pairwise_linear_kernel,
        out_shape=jax.ShapeDtypeStruct((rows, 128), x.dtype),
        grid=grid,
        in_specs=[
            # 2x2 weight resident in SMEM (scalar reads, no per-step DMA).
            pl.BlockSpec(memory_space=pltpu.MemorySpace.SMEM),
            # Batch-row-tiled flat input: dense 128-lane blocks.
            pl.BlockSpec((block_rows, 128), lambda i: (i, 0)),
        ],
        out_specs=pl.BlockSpec((block_rows, 128), lambda i: (i, 0)),
        compiler_params=pltpu.CompilerParams(
            dimension_semantics=("parallel",),
            vmem_limit_bytes=32 * 1024 * 1024,   # headroom on v5e's 16 MiB scoped default
        ),
    )(w, x_flat)

    y = y_flat.reshape(Bp, IN)                   # free view back to (Bp, 2)
    return y if Bp == B else y[:B, :]


if __name__ == "__main__":
    key = jax.random.PRNGKey(0)

    # Double-integrator state is 2-dimensional: x of shape (batch, 2).
    batch = 8
    x = jax.random.normal(key, (batch, 2), dtype=jnp.float32)

    # Deterministic parameter init matching the module: self.Cinv.weight.data = torch.eye(2)
    weight = jnp.eye(2, dtype=jnp.float32)

    y = jax.block_until_ready(double_integrator_compression(x, weight))
    assert y.shape == (batch, 2)
    assert jnp.allclose(y, x @ weight.T, atol=1e-6), "mismatch vs reference (identity W)"

    # Non-identity, non-symmetric weight through the small-batch path.
    w2 = jnp.array([[2.0, -1.0], [0.5, 3.0]], dtype=jnp.float32)
    y1 = jax.block_until_ready(double_integrator_compression(x, w2))
    assert jnp.allclose(y1, x @ w2.T, atol=1e-5), "mismatch vs reference (fallback, w2)"

    # Exercise the actual Pallas kernel path (native-layout, roll-based pairwise FMA).
    xb = jax.random.normal(jax.random.PRNGKey(0), (4096, 2), dtype=jnp.float32)
    y2 = jax.block_until_ready(double_integrator_compression(xb, w2, force_pallas=True))
    assert jnp.allclose(y2, xb @ w2.T, atol=1e-5), "mismatch vs reference (kernel, w2)"

    # Kernel path with a partial last block (rows not a multiple of block_rows).
    xp_ = jax.random.normal(jax.random.PRNGKey(1), (2560, 2), dtype=jnp.float32)
    y3 = jax.block_until_ready(double_integrator_compression(xp_, w2, force_pallas=True))
    assert jnp.allclose(y3, xp_ @ w2.T, atol=1e-5), "mismatch vs reference (partial block)"

    # Kernel path with a ragged batch (not a multiple of 64 -> padded once).
    xr = jax.random.normal(jax.random.PRNGKey(2), (1000, 2), dtype=jnp.float32)
    y4 = jax.block_until_ready(double_integrator_compression(xr, w2, force_pallas=True))
    assert y4.shape == (1000, 2)
    assert jnp.allclose(y4, xr @ w2.T, atol=1e-5), "mismatch vs reference (ragged batch)"

    print("KERNEL_OK")
</pallas_src>

<mosaic_0001>
module attributes {stable_mosaic.version = 11 : i64} {
  func.func @_pairwise_linear_kernel(%arg0: i32, %arg1: memref<2x2xf32, #tpu.memory_space<smem>>, %arg2: memref<32x128xf32, #tpu.memory_space<vmem>>, %arg3: memref<32x128xf32, #tpu.memory_space<vmem>>) attributes {dimension_semantics = [#tpu.dimension_semantics<parallel>], iteration_bounds = array<i64: 2>, scalar_prefetch = 0 : i64, scratch_operands = 0 : i64, tpu.core_type = #tpu.core_type<tc>, window_params = [{transform_indices = @transform_0, window_bounds = array<i64: 2, 2>}, {transform_indices = @transform_1, window_bounds = array<i64: 32, 128>}, {transform_indices = @transform_2, window_bounds = array<i64: 32, 128>}]} {
    %c0 = arith.constant 0 : index
    %c0_0 = arith.constant 0 : index
    %0 = vector.load %arg2[%c0, %c0_0] : memref<32x128xf32, #tpu.memory_space<vmem>>, vector<32x128xf32>
    %c127_i32 = arith.constant 127 : i32
    %1 = tpu.dynamic_rotate %0 by %c127_i32 dim 1 : vector<32x128xf32>, i32 -> vector<32x128xf32>
    %c1_i32 = arith.constant 1 : i32
    %2 = tpu.dynamic_rotate %0 by %c1_i32 dim 1 : vector<32x128xf32>, i32 -> vector<32x128xf32>
    %3 = tpu.iota {dimensions = array<i32: 1>} : vector<32x128xi32>
    %c1_i32_1 = arith.constant 1 : i32
    %4 = vector.broadcast %c1_i32_1 : i32 to vector<32x128xi32>
    %5 = arith.andi %3, %4 : vector<32x128xi32>
    %c0_i32 = arith.constant 0 : i32
    %6 = vector.broadcast %c0_i32 : i32 to vector<32x128xi32>
    %7 = arith.cmpi eq, %5, %6 : vector<32x128xi32>
    %8 = arith.select %7, %1, %2 : vector<32x128xi1>, vector<32x128xf32>
    %c0_2 = arith.constant 0 : index
    %c0_3 = arith.constant 0 : index
    %9 = memref.load %arg1[%c0_2, %c0_3] : memref<2x2xf32, #tpu.memory_space<smem>>
    %c0_4 = arith.constant 0 : index
    %c1 = arith.constant 1 : index
    %10 = memref.load %arg1[%c0_4, %c1] : memref<2x2xf32, #tpu.memory_space<smem>>
    %c1_5 = arith.constant 1 : index
    %c0_6 = arith.constant 0 : index
    %11 = memref.load %arg1[%c1_5, %c0_6] : memref<2x2xf32, #tpu.memory_space<smem>>
    %c1_7 = arith.constant 1 : index
    %c1_8 = arith.constant 1 : index
    %12 = memref.load %arg1[%c1_7, %c1_8] : memref<2x2xf32, #tpu.memory_space<smem>>
    %13 = vector.broadcast %9 : f32 to vector<32x128xf32>
    %14 = vector.broadcast %12 : f32 to vector<32x128xf32>
    %15 = arith.select %7, %13, %14 : vector<32x128xi1>, vector<32x128xf32>
    %16 = vector.broadcast %10 : f32 to vector<32x128xf32>
    %17 = vector.broadcast %11 : f32 to vector<32x128xf32>
    %18 = arith.select %7, %16, %17 : vector<32x128xi1>, vector<32x128xf32>
    %19 = arith.mulf %15, %0 : vector<32x128xf32>
    %20 = arith.mulf %18, %8 : vector<32x128xf32>
    %21 = arith.addf %19, %20 : vector<32x128xf32>
    %c0_9 = arith.constant 0 : index
    %c0_10 = arith.constant 0 : index
    %22 = vector.load %arg3[%c0_9, %c0_10] : memref<32x128xf32, #tpu.memory_space<vmem>>, vector<32x128xf32>
    tpu.vector_store %arg3[%c0_9, %c0_10], %21 {strides = array<i32>} : memref<32x128xf32, #tpu.memory_space<vmem>>, vector<32x128xf32>,
    return
  }
  func.func @transform_0(%arg0: i32) -> (i32, i32) {
    %c0_i32 = arith.constant 0 : i32
    %c0_i32_0 = arith.constant 0 : i32
    %c0_i32_1 = arith.constant 0 : i32
    return %c0_i32, %c0_i32_0 : i32, i32
  }
  func.func @transform_1(%arg0: i32) -> (i32, i32) {
    %c0_i32 = arith.constant 0 : i32
    %c0_i32_0 = arith.constant 0 : i32
    return %arg0, %c0_i32 : i32, i32
  }
  func.func @transform_2(%arg0: i32) -> (i32, i32) {
    %c0_i32 = arith.constant 0 : i32
    %c0_i32_0 = arith.constant 0 : i32
    return %arg0, %c0_i32 : i32, i32
  }
}

</mosaic_0001>

<llo_original>
// kernel: tpu_custom_call.1
$region0: #{tpu_custom_call.1}
  #allocation0 [shape = 'u32[]', space=smem, size = 0x4, offset = 0x4, fixed_abs, tag = 'smem constant byte address 0x4 - core index']
  #allocation1 [shape = 'u32[72,128]{1,0:T(1,128)}', space=vmem, size = 0x9000, scoped, tag = 'internal scratch']
  %s0 = inlined_call_operand.hbm [shape: f32[2,2], index: 0, kind: input, shape index: {}]
  %s1 = inlined_call_operand.hbm [shape: f32[64,128], index: 1, kind: input, shape index: {}]
  %s2 = inlined_call_operand.hbm [shape: f32[64,128], index: 2, kind: output, shape index: {}]
  %s3 = sld [smem:[#allocation0]]
  $region49: #{tpu_custom_call.1} parent=0
    _
  %s5 = ssub.s32 1, %s3
  %s6 = scalar_select 0, %s5, %s3
  $region1: #{tpu_custom_call.1} parent=0
    #allocation2 [shape = 'u8[1024]{0}', space=smem, size = 0x400, scoped, tag = 'input window, operand 0, single buffered']
    #allocation3 [shape = 's32[2]{0}', space=sflag, size = 0x8, scoped, tag = 'scoped memory for tpu_custom_call.1']
    #allocation4 [shape = 's32[2]{0}', space=sflag, size = 0x8, scoped, tag = 'scoped memory for tpu_custom_call.1']
    #allocation5 [shape = 's32[2]{0}', space=sflag, size = 0x8, scoped, tag = 'scoped memory for tpu_custom_call.1']
    #allocation6 [shape = 'u8[32768]{0}', space=vmem, size = 0x8000, scoped, tag = 'input window, operand 1']
    #allocation7 [shape = 'u8[32768]{0}', space=vmem, size = 0x8000, scoped, tag = 'output window, operand 0']
    %7 = vsyncpa [#allocation5], 0
    %8 = vsyncpa [#allocation3], 0
    %s9 = scalar_lea.sflag [#allocation3], 1
    %10 = vsyncpa %s9, 0
    %11 = vsyncpa [#allocation4], 0
    %s12 = scalar_lea.sflag [#allocation4], 1
    %13 = vsyncpa %s12, 0
    loop: start=0, step=1, limit=4
    $region2: #{tpu_custom_call.1} parent=1 // loop_pre_header
      _
    $region3: #{tpu_custom_call.1} parent=1 // loop_header
      %s15 = sphi 0, %s19
      %p16 = scmp.ge.s32.totalorder %s15, 4
      %s23 = sphi 0, %s23
      %s25 = sphi 0, %s23
      %s26 = sphi 0, %s25
      %s40 = sphi 0, %s26
      %s46 = sphi 0, %s48
      %s49 = sphi 0, %s46
      %s50 = sphi 0, %s49
      %s66 = sphi 0, %s50
      %s72 = sphi 0, %s74
      %s75 = sphi 0, %s72
      %s76 = sphi 0, %s75
      %s92 = sphi 0, %s76
    $region4: #{tpu_custom_call.1} parent=1 // loop_header_branch
      %18 = sbr.rel (%p16) target = $region8
    $region5: #{tpu_custom_call.1} parent=1 // loop_body
      %s20 = ssub.s32 %s15, 1
      %s21 = ssub.s32 %s15, 2
      %s22 = sadd.s32 %s15, 1
      %s24 = sadd.s32 %s23, 1
      %p27 = scmp.eq.s32.totalorder %s15, 1
      %p28 = scmp.ne.s32.totalorder %s23, %s25
      %p29 = scmp.eq.s32.totalorder %s15, 0
      %p30 = por %p28, %p29
      %p31 = scmp.ne.s32.totalorder %s23, %s25
      %p32 = scmp.eq.s32.totalorder %s20, 1
      %p33 = por %p31, %p32
      %p34 = scmp.ne.s32.totalorder %s25, %s26
      %p35 = scmp.eq.s32.totalorder %s20, 0
      %p36 = por %p34, %p35
      %p37 = scmp.ne.s32.totalorder %s25, %s26
      %p38 = scmp.eq.s32.totalorder %s21, 1
      %p39 = por %p37, %p38
      %p41 = scmp.ne.s32.totalorder %s26, %s40
      %p42 = scmp.eq.s32.totalorder %s21, 0
      %p43 = por %p41, %p42
      %s44 = ssub.s32 %s15, %s22
      %p45 = scmp.eq.s32.totalorder %s44, 0
      %s47 = sadd.s32 %s46, 1
      %s48 = scalar_select %p45, %s46, %s47
      %p51 = pneg %p45
      %p52 = scmp.eq.s32.totalorder %s15, 1
      %p53 = por %p51, %p52
      %p54 = scmp.ne.s32.totalorder %s46, %s49
      %p55 = scmp.eq.s32.totalorder %s15, 0
      %p56 = por %p54, %p55
      %p57 = scmp.ne.s32.totalorder %s46, %s49
      %p58 = scmp.eq.s32.totalorder %s20, 1
      %p59 = por %p57, %p58
      %p60 = scmp.ne.s32.totalorder %s49, %s50
      %p61 = scmp.eq.s32.totalorder %s20, 0
      %p62 = por %p60, %p61
      %p63 = scmp.ne.s32.totalorder %s49, %s50
      %p64 = scmp.eq.s32.totalorder %s21, 1
      %p65 = por %p63, %p64
      %p67 = scmp.ne.s32.totalorder %s50, %s66
      %p68 = scmp.eq.s32.totalorder %s21, 0
      %p69 = por %p67, %p68
      %s70 = ssub.s32 %s15, %s22
      %p71 = scmp.eq.s32.totalorder %s70, 0
      %s73 = sadd.s32 %s72, 1
      %s74 = scalar_select %p71, %s72, %s73
      %p77 = pneg %p71
      %p78 = scmp.eq.s32.totalorder %s15, 1
      %p79 = por %p77, %p78
      %p80 = scmp.ne.s32.totalorder %s72, %s75
      %p81 = scmp.eq.s32.totalorder %s15, 0
      %p82 = por %p80, %p81
      %p83 = scmp.ne.s32.totalorder %s72, %s75
      %p84 = scmp.eq.s32.totalorder %s20, 1
      %p85 = por %p83, %p84
      %p86 = scmp.ne.s32.totalorder %s75, %s76
      %p87 = scmp.eq.s32.totalorder %s20, 0
      %p88 = por %p86, %p87
      %p89 = scmp.ne.s32.totalorder %s75, %s76
      %p90 = scmp.eq.s32.totalorder %s21, 1
      %p91 = por %p89, %p90
      %p93 = scmp.ne.s32.totalorder %s76, %s92
      %p94 = scmp.eq.s32.totalorder %s21, 0
      %p95 = por %p93, %p94
      %p96 = scmp.le.s32.totalorder 1, %s15
      %p97 = scmp.lt.s32.totalorder %s15, 3
      %p98 = pnand %p96, %p97
      %p99 = pneg %p98
      // Predicated region
      $region9: #{tpu_custom_call.1} parent=5 // pred_check
        _
      $region10: #{tpu_custom_call.1} parent=5 // pred_check_branch
        %101 = sbr.rel (%p98) target = $region12
      $region11: #{tpu_custom_call.1} parent=5 // pred_region
        %s102 = ssub.s32 %s15, 1
        // Predicated region
        $region13: #{tpu_custom_call.1} parent=11 // pred_check
          %p103 = pneg %p36
        $region14: #{tpu_custom_call.1} parent=11 // pred_check_branch
          %105 = sbr.rel (%p103) target = $region16
        $region15: #{tpu_custom_call.1} parent=11 // pred_region
          %107 = vsyncadd [#allocation5], 0
          %s109 = sshll.u32 %s0, 4
          %s110 = int_to_ptr.hbm [resolvable:$true] %s109
          %112 = dma.hbm_to_smem %s110, 32, [#allocation2], [#allocation5]
        $region16: #{tpu_custom_call.1} parent=11 // pred_fallthru
          _
      $region12: #{tpu_custom_call.1} parent=5 // pred_fallthru
        _
      %p113 = scmp.lt.s32.totalorder %s15, 2
      // Predicated region
      $region17: #{tpu_custom_call.1} parent=5 // pred_check
        %p114 = pneg %p113
      $region18: #{tpu_custom_call.1} parent=5 // pred_check_branch
        %116 = sbr.rel (%p114) target = $region20
      $region19: #{tpu_custom_call.1} parent=5 // pred_region
        // Predicated region
        $region21: #{tpu_custom_call.1} parent=19 // pred_check
          %p117 = pneg %p56
        $region22: #{tpu_custom_call.1} parent=19 // pred_check_branch
          %119 = sbr.rel (%p117) target = $region24
        $region23: #{tpu_custom_call.1} parent=19 // pred_region
          %s120 = sand.u32 %s46, 1
          %s121 = scalar_lea.sflag [#allocation3], %s120
          %s122 = sand.u32 %s46, 1
          %s123 = smul.addr %s122, 32
          %s124 = scalar_lea.vmem [#allocation6], %s123
          %s125 = smul.u32 4, %s15
          %127 = vsyncadd %s121, 0
          %s128 = smul.addr %s125, 8
          %s129 = scalar_lea.hbm %s1, %s128
          %s130 = sshll.u32 %s129, 4
          %s131 = int_to_ptr.hbm [resolvable:$true] %s130
          %s132 = sshll.u32 %s124, 4
          %s133 = int_to_ptr.vmem [resolvable:$true] %s132
          %138 = dma.hbm_to_vmem [thread:$0]  %s131, 512, %s133, %s121, 128, 128, 8
        $region24: #{tpu_custom_call.1} parent=19 // pred_fallthru
          _
      $region20: #{tpu_custom_call.1} parent=5 // pred_fallthru
        _
      %p139 = scmp.le.s32.totalorder 1, %s15
      %p140 = scmp.lt.s32.totalorder %s15, 3
      %p141 = pnand %p139, %p140
      %p142 = pneg %p141
      // Predicated region
      $region25: #{tpu_custom_call.1} parent=5 // pred_check
        _
      $region26: #{tpu_custom_call.1} parent=5 // pred_check_branch
        %144 = sbr.rel (%p141) target = $region28
      $region27: #{tpu_custom_call.1} parent=5 // pred_region
        %s145 = ssub.s32 %s15, 1
        // Predicated region
        $region29: #{tpu_custom_call.1} parent=27 // pred_check
          %p146 = pneg %p36
        $region30: #{tpu_custom_call.1} parent=27 // pred_check_branch
          %148 = sbr.rel (%p146) target = $region32
        $region31: #{tpu_custom_call.1} parent=27 // pred_region
          %150 = dma.done [#allocation5], 32
        $region32: #{tpu_custom_call.1} parent=27 // pred_fallthru
          _
        %s151 = sand.u32 %s49, 1
        %s152 = scalar_lea.sflag [#allocation3], %s151
        %s153 = sand.u32 %s49, 1
        %s154 = smul.addr %s153, 32
        %s155 = scalar_lea.vmem [#allocation6], %s154
        // Predicated region
        $region33: #{tpu_custom_call.1} parent=27 // pred_check
          %p156 = pneg %p62
        $region34: #{tpu_custom_call.1} parent=27 // pred_check_branch
          %158 = sbr.rel (%p156) target = $region36
        $region35: #{tpu_custom_call.1} parent=27 // pred_region
          %160 = dma.done %s152, 512
        $region36: #{tpu_custom_call.1} parent=27 // pred_fallthru
          _
        %161 = sfence
        %p162 = pneg %p36
        %p163 = pneg %p33
        %s164 = sand.u32 %s49, 1
        %s165 = scalar_lea.sflag [#allocation3], %s164
        %s166 = sand.u32 %s49, 1
        %s167 = smul.addr %s166, 32
        %s168 = scalar_lea.vmem [#allocation6], %s167
        %p169 = pneg %p62
        %p170 = pneg %p59
        %p171 = pneg %p88
        %p172 = pneg %p85
        %s173 = sand.u32 %s75, 1
        %s174 = scalar_lea.sflag [#allocation4], %s173
        %s175 = sand.u32 %s75, 1
        %s176 = smul.addr %s175, 32
        %s177 = scalar_lea.vmem [#allocation7], %s176
        %s178 = smul.u32 4, %s20
        %s179 = smul.u32 4, %s20
        %v180 = vld [vmem:[%s155] sm:$0xff]
        %v181 = vld [vmem:[%s155 + $0x8] sm:$0xff]
        %v182 = vld [vmem:[%s155 + $0x10] sm:$0xff]
        %v183 = vld [vmem:[%s155 + $0x18] sm:$0xff]
        %184 = vrot.lane.b32.xlu0 %v180, 127
        %v185 = vpop.permute.xlu0 %184
        %186 = vrot.lane.b32.xlu0 %v181, 127
        %v187 = vpop.permute.xlu0 %186
        %188 = vrot.lane.b32.xlu0 %v182, 127
        %v189 = vpop.permute.xlu0 %188
        %190 = vrot.lane.b32.xlu0 %v183, 127
        %v191 = vpop.permute.xlu0 %190
        %192 = vrot.lane.b32.xlu0 %v180, 1
        %v193 = vpop.permute.xlu0 %192
        %194 = vrot.lane.b32.xlu0 %v181, 1
        %v195 = vpop.permute.xlu0 %194
        %196 = vrot.lane.b32.xlu0 %v182, 1
        %v197 = vpop.permute.xlu0 %196
        %198 = vrot.lane.b32.xlu0 %v183, 1
        %v199 = vpop.permute.xlu0 %198
        %v200 = vlaneseq
        %v201 = vand.u32 %v200, 127
        %v202 = vand.u32 %v201, 1
        %vm203 = vcmp.eq.s32.totalorder %v202, 0
        %v204 = vsel %vm203, %v185, %v193
        %v205 = vsel %vm203, %v187, %v195
        %v206 = vsel %vm203, %v189, %v197
        %v207 = vsel %vm203, %v191, %v199
        %s208 = sld [smem:[#allocation2]]
        %s209 = sld [smem:[#allocation2 + $0x1]]
        %s210 = sld [smem:[#allocation2 + $0x80]]
        %s211 = sld [smem:[#allocation2 + $0x81]]
        %v212 = vstv %s208
        %v213 = vstv %s211
        %v214 = vsel %vm203, %v212, %v213
        %v215 = vstv %s209
        %v216 = vstv %s210
        %v217 = vsel %vm203, %v215, %v216
        %v218 = vmul.f32 %v214, %v180
        %v219 = vmul.f32 %v214, %v181
        %v220 = vmul.f32 %v214, %v182
        %v221 = vmul.f32 %v214, %v183
        %v222 = vmul.f32 %v217, %v204
        %v223 = vmul.f32 %v217, %v205
        %v224 = vmul.f32 %v217, %v206
        %v225 = vmul.f32 %v217, %v207
        %v226 = vadd.f32 %v218, %v222
        %v227 = vadd.f32 %v219, %v223
        %v228 = vadd.f32 %v220, %v224
        %v229 = vadd.f32 %v221, %v225
        %230 = vst [vmem:[%s177] sm:$0xff] %v226
        %231 = vst [vmem:[%s177 + $0x8] sm:$0xff] %v227
        %232 = vst [vmem:[%s177 + $0x10] sm:$0xff] %v228
        %233 = vst [vmem:[%s177 + $0x18] sm:$0xff] %v229
        %s234 = sand.u32 %s75, 1
        %s235 = scalar_lea.sflag [#allocation4], %s234
        %s236 = sand.u32 %s75, 1
        %s237 = smul.addr %s236, 32
        %s238 = scalar_lea.vmem [#allocation7], %s237
        // Predicated region
        $region37: #{tpu_custom_call.1} parent=27 // pred_check
          %p239 = pneg %p85
        $region38: #{tpu_custom_call.1} parent=27 // pred_check_branch
          %241 = sbr.rel (%p239) target = $region40
        $region39: #{tpu_custom_call.1} parent=27 // pred_region
          %s242 = smul.u32 4, %s20
          %244 = vsyncadd %s235, 0
          %s245 = smul.addr %s242, 8
          %s246 = scalar_lea.hbm %s2, %s245
          %s247 = sshll.u32 %s238, 4
          %s248 = int_to_ptr.vmem [resolvable:$true] %s247
          %s249 = sshll.u32 %s246, 4
          %s250 = int_to_ptr.hbm [resolvable:$true] %s249
          %255 = dma.vmem_to_hbm [thread:$0]  %s248, 512, %s250, %s235, 128, 128, 8
        $region40: #{tpu_custom_call.1} parent=27 // pred_fallthru
          _
      $region28: #{tpu_custom_call.1} parent=5 // pred_fallthru
        _
      %p256 = scmp.le.s32.totalorder 2, %s15
      // Predicated region
      $region41: #{tpu_custom_call.1} parent=5 // pred_check
        %p257 = pneg %p256
      $region42: #{tpu_custom_call.1} parent=5 // pred_check_branch
        %259 = sbr.rel (%p257) target = $region44
      $region43: #{tpu_custom_call.1} parent=5 // pred_region
        %s260 = ssub.s32 %s15, 2
        // Predicated region
        $region45: #{tpu_custom_call.1} parent=43 // pred_check
          %p261 = pneg %p91
        $region46: #{tpu_custom_call.1} parent=43 // pred_check_branch
          %263 = sbr.rel (%p261) target = $region48
        $region47: #{tpu_custom_call.1} parent=43 // pred_region
          %s264 = sand.u32 %s76, 1
          %s265 = scalar_lea.sflag [#allocation4], %s264
          %s266 = sand.u32 %s76, 1
          %s267 = smul.addr %s266, 32
          %s268 = scalar_lea.vmem [#allocation7], %s267
          %270 = dma.done %s265, 512
        $region48: #{tpu_custom_call.1} parent=43 // pred_fallthru
          _
      $region44: #{tpu_custom_call.1} parent=5 // pred_fallthru
        _
    $region6: #{tpu_custom_call.1} parent=1 // loop_footer
      %s19 = sadd.s32 1, %s15
    $region7: #{tpu_custom_call.1} parent=1 // loop_footer_branch
      %14 = sbr.rel target = $region3
    $region8: #{tpu_custom_call.1} parent=1 // loop_exit
      _
    %271 = vsyncpa [#allocation3], 1
    %s272 = scalar_lea.sflag [#allocation3], 1
    %273 = vsyncpa %s272, 1
    %274 = vsyncpa [#allocation4], 1
    %s275 = scalar_lea.sflag [#allocation4], 1
    %276 = vsyncpa %s275, 1
    %277 = vsyncpa [#allocation5], 1
    %s278 = scalar_lea.sflag [#allocation5], 1
    %279 = vsyncpa %s278, 1

</llo_original>
